<compile_context>
chip_gen: v6e
topology: v6e:2x2x1
jax: 0.10.0
libtpu: 0.0.40
codegen_flags: <defaults>
</compile_context>

<pallas_src>
import math
import functools

import jax
import jax.numpy as jnp
from jax import lax
from jax.experimental import pallas as pl
from jax.experimental.pallas import tpu as pltpu


def _round_up(v, m):
    return (v + m - 1) // m * m


def _cdiv(a, b):
    return (a + b - 1) // b


def _conv1x1_bn_act_kernel(x_ref, w_ref, shift_ref, o_ref, *,
                           apply_relu, compute_dtype):
    # x_ref:     (1, C_in, tn)  VMEM, input dtype (cast in-kernel: no extra HBM pass)
    # w_ref:     (C_out, C_in)  VMEM, compute dtype, BN scale pre-folded, grid-resident
    # shift_ref: (C_out, 1)     VMEM, f32, conv bias + BN shift folded, grid-resident
    # o_ref:     (1, C_out, tn) VMEM, output dtype
    x = x_ref[0].astype(compute_dtype)                                  # (C_in, tn)
    acc = jnp.dot(w_ref[...], x, preferred_element_type=jnp.float32)   # (C_out, tn)
    y = acc + shift_ref[...]            # fused conv bias + inference-BN shift (f32)
    if apply_relu:
        y = jnp.maximum(y, 0.0)
    o_ref[0] = y.astype(o_ref.dtype)


@functools.partial(
    jax.jit,
    static_argnames=("stride", "if_bn", "apply_relu", "eps", "tn_max",
                     "compute_dtype", "out_dtype"))
def conv1d_forward(x, weight, bias, gamma, beta, running_mean, running_var,
                   *, stride=1, if_bn=True, apply_relu=True, eps=1e-5,
                   tn_max=512, compute_dtype=jnp.bfloat16, out_dtype=None):
    """x: (B, C_in, N); weight: (C_out, C_in, 1) or (C_out, C_in); bias: (C_out,).
    Returns (B, C_out, N_out)."""
    B, C_in, N = x.shape
    if weight.ndim == 3:
        # kernel_size must be 1 (module default); squeeze the taps axis.
        weight = weight[..., 0]
    C_out = weight.shape[0]
    out_dtype = x.dtype if out_dtype is None else out_dtype

    # TODO(synk): fold the stride into the position index_map instead of this
    # extra XLA pass over x (only matters for non-default strided configs).
    if stride != 1:
        x = x[:, :, ::stride]
    N_out = x.shape[2]

    # Fold inference BatchNorm into the conv weight / bias, in f32 *before* any
    # low-precision cast:
    #   y = scale*(W x + b - mean) + beta = (scale*W) x + (scale*b + beta - scale*mean)
    w_f32 = weight.astype(jnp.float32)
    b_f32 = bias.astype(jnp.float32)
    if if_bn:
        scale = gamma.astype(jnp.float32) * lax.rsqrt(
            running_var.astype(jnp.float32) + eps)
        shift = beta.astype(jnp.float32) - running_mean.astype(jnp.float32) * scale
        w_f32 = w_f32 * scale[:, None]
        shift = shift + b_f32 * scale
    else:
        shift = b_f32
    w_k = w_f32.astype(compute_dtype)         # (C_out, C_in), tiny
    shift_k = shift.reshape(C_out, 1)         # (C_out, 1), f32

    # Position-tile size: N is the lane axis (native layout, no transposes).
    if N_out < 128:
        tn = N_out                             # full-dim block (exempt from 128 alignment)
        n_tiles = 1
    else:
        min_tiles = 2 if B == 1 else 1         # keep >= 2 grid steps for v7x's 2 TCs
        tn = max(128, min(tn_max, _round_up(_cdiv(N_out, min_tiles), 128)))
        n_tiles = _cdiv(N_out, tn)

    kernel = functools.partial(_conv1x1_bn_act_kernel,
                               apply_relu=apply_relu,
                               compute_dtype=compute_dtype)

    out = pl.pallas_call(
        kernel,
        out_shape=jax.ShapeDtypeStruct((B, C_out, N_out), out_dtype),
        grid_spec=pltpu.PrefetchScalarGridSpec(
            num_scalar_prefetch=0,
            grid=(B, n_tiles),
            in_specs=[
                pl.BlockSpec((1, C_in, tn), lambda b, j: (b, 0, j)),
                # Constant-index weight / shift blocks stay resident in VMEM.
                pl.BlockSpec((C_out, C_in), lambda b, j: (0, 0)),
                pl.BlockSpec((C_out, 1), lambda b, j: (0, 0)),
            ],
            out_specs=pl.BlockSpec((1, C_out, tn), lambda b, j: (b, 0, j)),
        ),
        compiler_params=pltpu.CompilerParams(
            dimension_semantics=("parallel", "parallel"),
            # Below physical VMEM on every generation (v7x = 64 MiB/TC), above
            # the 16/32 MiB scoped defaults so the resident weight plus
            # double-buffered 512-wide activation/output tiles fit.
            vmem_limit_bytes=48 * 1024 * 1024,
        ),
    )(x, w_k, shift_k)

    return out


def init_conv1d_params(key, in_channel, out_channel, dtype=jnp.float32):
    """Deterministic init mimicking nn.Conv1d(k=1) + fresh-ish BatchNorm1d."""
    kw, kb, kg, kbeta, km, kv = jax.random.split(key, 6)
    lim = 1.0 / math.sqrt(in_channel)  # fan_in = C_in * kernel_size(=1)
    weight = jax.random.uniform(kw, (out_channel, in_channel, 1), dtype, -lim, lim)
    bias = jax.random.uniform(kb, (out_channel,), dtype, -lim, lim)
    gamma = jax.random.uniform(kg, (out_channel,), dtype, 0.5, 1.5)
    beta = 0.1 * jax.random.normal(kbeta, (out_channel,), dtype)
    running_mean = 0.1 * jax.random.normal(km, (out_channel,), dtype)
    running_var = jax.random.uniform(kv, (out_channel,), dtype, 0.5, 1.5)
    return weight, bias, gamma, beta, running_mean, running_var


if __name__ == "__main__":
    key = jax.random.PRNGKey(0)
    kx, kp = jax.random.split(key)

    # Small shapes: batch=2, in_channels=4, spatial=16, out_channels=8.
    B, C_in, N = 2, 4, 16
    C_out = 8
    eps = 1e-5

    x = jax.random.normal(kx, (B, C_in, N), jnp.float32)
    weight, bias, gamma, beta, rmean, rvar = init_conv1d_params(kp, C_in, C_out)

    # Pallas kernel: bf16 MXU inputs (cast in-kernel), f32 accumulation.
    y_bf16 = conv1d_forward(x, weight, bias, gamma, beta, rmean, rvar,
                            compute_dtype=jnp.bfloat16)
    y_bf16 = jax.block_until_ready(y_bf16)

    # Pallas kernel: full f32 path.
    y_f32 = conv1d_forward(x, weight, bias, gamma, beta, rmean, rvar,
                           compute_dtype=jnp.float32)
    y_f32 = jax.block_until_ready(y_f32)

    # Pure-JAX reference: 1x1 conv -> inference BatchNorm -> ReLU.
    w2d = weight[..., 0]
    conv_ref = jnp.einsum("bin,oi->bon", x, w2d,
                          precision=lax.Precision.HIGHEST) + bias[None, :, None]
    bn_ref = (conv_ref - rmean[None, :, None]) * (
        gamma[None, :, None] / jnp.sqrt(rvar[None, :, None] + eps)
    ) + beta[None, :, None]
    y_ref = jnp.maximum(bn_ref, 0.0)

    assert y_bf16.shape == (B, C_out, N)
    assert y_f32.shape == (B, C_out, N)
    assert jnp.allclose(y_f32, y_ref, atol=1e-3, rtol=1e-3)
    assert jnp.allclose(y_bf16, y_ref, atol=5e-2, rtol=5e-2)

    print("KERNEL_OK")
</pallas_src>

<mosaic_0001>
module attributes {stable_mosaic.version = 11 : i64} {
  func.func @_conv1x1_bn_act_kernel(%arg0: i32, %arg1: i32, %arg2: memref<1x4x16xf32, #tpu.memory_space<vmem>>, %arg3: memref<8x4xbf16, #tpu.memory_space<vmem>>, %arg4: memref<8x1xf32, #tpu.memory_space<vmem>>, %arg5: memref<1x8x16xf32, #tpu.memory_space<vmem>>) attributes {dimension_semantics = [#tpu.dimension_semantics<parallel>, #tpu.dimension_semantics<parallel>], iteration_bounds = array<i64: 2, 1>, scalar_prefetch = 0 : i64, scratch_operands = 0 : i64, tpu.core_type = #tpu.core_type<tc>, window_params = [{transform_indices = @transform_0, window_bounds = array<i64: 1, 4, 16>}, {pipeline_mode = #tpu.pipeline_mode<synchronous>, transform_indices = @transform_1, window_bounds = array<i64: 8, 4>}, {pipeline_mode = #tpu.pipeline_mode<synchronous>, transform_indices = @transform_2, window_bounds = array<i64: 8, 1>}, {transform_indices = @transform_3, window_bounds = array<i64: 1, 8, 16>}]} {
    %c0 = arith.constant 0 : index
    %c0_0 = arith.constant 0 : index
    %c0_1 = arith.constant 0 : index
    %0 = vector.load %arg2[%c0, %c0_0, %c0_1] : memref<1x4x16xf32, #tpu.memory_space<vmem>>, vector<1x4x16xf32>
    %1 = vector.shape_cast %0 : vector<1x4x16xf32> to vector<4x16xf32>
    %2 = arith.truncf %1 : vector<4x16xf32> to vector<4x16xbf16>
    %c0_2 = arith.constant 0 : index
    %c0_3 = arith.constant 0 : index
    %3 = vector.load %arg3[%c0_2, %c0_3] : memref<8x4xbf16, #tpu.memory_space<vmem>>, vector<8x4xbf16>
    %cst = arith.constant dense<0.000000e+00> : vector<8x16xf32>
    %4 = tpu.matmul %3, %2, %cst {dimension_numbers = #tpu.dot_dimension_numbers<[1], [0], [0], [1], [0, 0, 1, 1], [], []>} : vector<8x4xbf16>, vector<4x16xbf16>, vector<8x16xf32> -> vector<8x16xf32>
    %c0_4 = arith.constant 0 : index
    %c0_5 = arith.constant 0 : index
    %5 = vector.load %arg4[%c0_4, %c0_5] : memref<8x1xf32, #tpu.memory_space<vmem>>, vector<8x1xf32>
    %6 = vector.broadcast %5 : vector<8x1xf32> to vector<8x16xf32>
    %7 = arith.addf %4, %6 : vector<8x16xf32>
    %cst_6 = arith.constant 0.000000e+00 : f32
    %8 = vector.broadcast %cst_6 : f32 to vector<8x16xf32>
    %9 = arith.maximumf %7, %8 : vector<8x16xf32>
    %c0_7 = arith.constant 0 : index
    %c0_8 = arith.constant 0 : index
    %c0_9 = arith.constant 0 : index
    %10 = vector.load %arg5[%c0_7, %c0_8, %c0_9] : memref<1x8x16xf32, #tpu.memory_space<vmem>>, vector<1x8x16xf32>
    %11 = vector.shape_cast %10 : vector<1x8x16xf32> to vector<8x16xf32>
    %12 = vector.shape_cast %9 : vector<8x16xf32> to vector<1x8x16xf32>
    tpu.vector_store %arg5[%c0_7, %c0_8, %c0_9], %12 {strides = array<i32>} : memref<1x8x16xf32, #tpu.memory_space<vmem>>, vector<1x8x16xf32>,
    return
  }
  func.func @transform_0(%arg0: i32, %arg1: i32) -> (i32, i32, i32) {
    %c0_i32 = arith.constant 0 : i32
    %c0_i32_0 = arith.constant 0 : i32
    return %arg0, %c0_i32, %arg1 : i32, i32, i32
  }
  func.func @transform_1(%arg0: i32, %arg1: i32) -> (i32, i32) {
    %c0_i32 = arith.constant 0 : i32
    %c0_i32_0 = arith.constant 0 : i32
    %c0_i32_1 = arith.constant 0 : i32
    return %c0_i32, %c0_i32_0 : i32, i32
  }
  func.func @transform_2(%arg0: i32, %arg1: i32) -> (i32, i32) {
    %c0_i32 = arith.constant 0 : i32
    %c0_i32_0 = arith.constant 0 : i32
    %c0_i32_1 = arith.constant 0 : i32
    return %c0_i32, %c0_i32_0 : i32, i32
  }
  func.func @transform_3(%arg0: i32, %arg1: i32) -> (i32, i32, i32) {
    %c0_i32 = arith.constant 0 : i32
    %c0_i32_0 = arith.constant 0 : i32
    return %arg0, %c0_i32, %arg1 : i32, i32, i32
  }
}

</mosaic_0001>

<llo_original>
// kernel: conv1d_forward.1
$region0: #{conv1d_forward.1}
  #allocation0 [shape = 'u32[]', space=smem, size = 0x4, offset = 0x4, fixed_abs, tag = 'smem constant byte address 0x4 - core index']
  #allocation1 [shape = 'u32[144,128]{1,0:T(1,128)}', space=vmem, size = 0x12000, scoped, tag = 'internal scratch']
  %s0 = inlined_call_operand.vmem [shape: f32[2,4,16], index: 0, kind: input, shape index: {}]
  %s1 = inlined_call_operand.vmem [shape: bf16[8,4], index: 1, kind: input, shape index: {}]
  %s2 = inlined_call_operand.vmem [shape: f32[8,1], index: 2, kind: input, shape index: {}]
  %s3 = inlined_call_operand.hbm [shape: f32[2,8,16], index: 3, kind: output, shape index: {}]
  %s4 = sld [smem:[#allocation0]]
  $region45: #{conv1d_forward.1} parent=0
    _
  %s6 = ssub.s32 1, %s4
  %s7 = scalar_select 0, %s6, %s4
  $region1: #{conv1d_forward.1} parent=0
    #allocation2 [shape = 'u8[8192]{0}', space=vmem, size = 0x2000, scoped, tag = 'output window, operand 0']
    #allocation3 [shape = 's32[2]{0}', space=sflag, size = 0x8, scoped, tag = 'scoped memory for conv1d_forward.1']
    %8 = vsyncpa [#allocation3], 0
    %s9 = scalar_lea.sflag [#allocation3], 1
    %10 = vsyncpa %s9, 0
    loop: start=0, step=1, limit=4
    $region2: #{conv1d_forward.1} parent=1 // loop_pre_header
      _
    $region3: #{conv1d_forward.1} parent=1 // loop_header
      %s12 = sphi 0, %s16
      %p13 = scmp.ge.s32.totalorder %s12, 4
      %s19 = sphi 0, %s31
      %s20 = sphi 0, %s27
      %s21 = sphi 0, %s19
      %s22 = sphi 0, %s20
      %s23 = sphi 0, %s21
      %s24 = sphi 0, %s22
      %s36 = sphi 0, %s38
      %s39 = sphi 0, %s36
      %s40 = sphi 0, %s39
      %s56 = sphi 0, %s40
      %s60 = sphi 0, %s60
      %s62 = sphi 0, %s60
      %s63 = sphi 0, %s62
      %s77 = sphi 0, %s63
      %s81 = sphi 0, %s81
      %s83 = sphi 0, %s81
      %s84 = sphi 0, %s83
      %s98 = sphi 0, %s84
      %s106 = sphi 0, %s108
      %s109 = sphi 0, %s106
      %s110 = sphi 0, %s109
      %s126 = sphi 0, %s110
    $region4: #{conv1d_forward.1} parent=1 // loop_header_branch
      %15 = sbr.rel (%p13) target = $region8
    $region5: #{conv1d_forward.1} parent=1 // loop_body
      %s17 = ssub.s32 %s12, 1
      %s18 = ssub.s32 %s12, 2
      %s25 = sadd.s32 1, %s20
      %p26 = scmp.ge.s32.totalorder %s25, 1
      %s27 = scalar_select %p26, 0, %s25
      %s28 = sadd.s32 1, %s19
      %s29 = scalar_select %p26, %s28, %s19
      %p30 = scmp.ge.s32.totalorder %s29, 2
      %s31 = scalar_select %p30, 0, %s29
      %s32 = ssub.s32 %s19, %s31
      %s33 = ssub.s32 %s20, %s27
      %s34 = sor.u32 %s32, %s33
      %p35 = scmp.eq.s32.totalorder %s34, 0
      %s37 = sadd.s32 %s36, 1
      %s38 = scalar_select %p35, %s36, %s37
      %p41 = pneg %p35
      %p42 = scmp.eq.s32.totalorder %s12, 1
      %p43 = por %p41, %p42
      %p44 = scmp.ne.s32.totalorder %s36, %s39
      %p45 = scmp.eq.s32.totalorder %s12, 0
      %p46 = por %p44, %p45
      %p47 = scmp.ne.s32.totalorder %s36, %s39
      %p48 = scmp.eq.s32.totalorder %s17, 1
      %p49 = por %p47, %p48
      %p50 = scmp.ne.s32.totalorder %s39, %s40
      %p51 = scmp.eq.s32.totalorder %s17, 0
      %p52 = por %p50, %p51
      %p53 = scmp.ne.s32.totalorder %s39, %s40
      %p54 = scmp.eq.s32.totalorder %s18, 1
      %p55 = por %p53, %p54
      %p57 = scmp.ne.s32.totalorder %s40, %s56
      %p58 = scmp.eq.s32.totalorder %s18, 0
      %p59 = por %p57, %p58
      %s61 = sadd.s32 %s60, 1
      %p64 = scmp.eq.s32.totalorder %s12, 1
      %p65 = scmp.ne.s32.totalorder %s60, %s62
      %p66 = scmp.eq.s32.totalorder %s12, 0
      %p67 = por %p65, %p66
      %p68 = scmp.ne.s32.totalorder %s60, %s62
      %p69 = scmp.eq.s32.totalorder %s17, 1
      %p70 = por %p68, %p69
      %p71 = scmp.ne.s32.totalorder %s62, %s63
      %p72 = scmp.eq.s32.totalorder %s17, 0
      %p73 = por %p71, %p72
      %p74 = scmp.ne.s32.totalorder %s62, %s63
      %p75 = scmp.eq.s32.totalorder %s18, 1
      %p76 = por %p74, %p75
      %p78 = scmp.ne.s32.totalorder %s63, %s77
      %p79 = scmp.eq.s32.totalorder %s18, 0
      %p80 = por %p78, %p79
      %s82 = sadd.s32 %s81, 1
      %p85 = scmp.eq.s32.totalorder %s12, 1
      %p86 = scmp.ne.s32.totalorder %s81, %s83
      %p87 = scmp.eq.s32.totalorder %s12, 0
      %p88 = por %p86, %p87
      %p89 = scmp.ne.s32.totalorder %s81, %s83
      %p90 = scmp.eq.s32.totalorder %s17, 1
      %p91 = por %p89, %p90
      %p92 = scmp.ne.s32.totalorder %s83, %s84
      %p93 = scmp.eq.s32.totalorder %s17, 0
      %p94 = por %p92, %p93
      %p95 = scmp.ne.s32.totalorder %s83, %s84
      %p96 = scmp.eq.s32.totalorder %s18, 1
      %p97 = por %p95, %p96
      %p99 = scmp.ne.s32.totalorder %s84, %s98
      %p100 = scmp.eq.s32.totalorder %s18, 0
      %p101 = por %p99, %p100
      %s102 = ssub.s32 %s19, %s31
      %s103 = ssub.s32 %s20, %s27
      %s104 = sor.u32 %s102, %s103
      %p105 = scmp.eq.s32.totalorder %s104, 0
      %s107 = sadd.s32 %s106, 1
      %s108 = scalar_select %p105, %s106, %s107
      %p111 = pneg %p105
      %p112 = scmp.eq.s32.totalorder %s12, 1
      %p113 = por %p111, %p112
      %p114 = scmp.ne.s32.totalorder %s106, %s109
      %p115 = scmp.eq.s32.totalorder %s12, 0
      %p116 = por %p114, %p115
      %p117 = scmp.ne.s32.totalorder %s106, %s109
      %p118 = scmp.eq.s32.totalorder %s17, 1
      %p119 = por %p117, %p118
      %p120 = scmp.ne.s32.totalorder %s109, %s110
      %p121 = scmp.eq.s32.totalorder %s17, 0
      %p122 = por %p120, %p121
      %p123 = scmp.ne.s32.totalorder %s109, %s110
      %p124 = scmp.eq.s32.totalorder %s18, 1
      %p125 = por %p123, %p124
      %p127 = scmp.ne.s32.totalorder %s110, %s126
      %p128 = scmp.eq.s32.totalorder %s18, 0
      %p129 = por %p127, %p128
      %p130 = scmp.le.s32.totalorder 1, %s12
      %p131 = scmp.lt.s32.totalorder %s12, 3
      %p132 = pnand %p130, %p131
      %p133 = pneg %p132
      // Predicated region
      $region9: #{conv1d_forward.1} parent=5 // pred_check
        _
      $region10: #{conv1d_forward.1} parent=5 // pred_check_branch
        %135 = sbr.rel (%p132) target = $region12
      $region11: #{conv1d_forward.1} parent=5 // pred_region
        %s136 = ssub.s32 %s12, 1
        // Predicated region
        $region13: #{conv1d_forward.1} parent=11 // pred_check
          %p137 = pneg %p73
        $region14: #{conv1d_forward.1} parent=11 // pred_check_branch
          %139 = sbr.rel (%p137) target = $region16
        $region15: #{conv1d_forward.1} parent=11 // pred_region
          _
        $region16: #{conv1d_forward.1} parent=11 // pred_fallthru
          _
        // Predicated region
        $region17: #{conv1d_forward.1} parent=11 // pred_check
          %p140 = pneg %p94
        $region18: #{conv1d_forward.1} parent=11 // pred_check_branch
          %142 = sbr.rel (%p140) target = $region20
        $region19: #{conv1d_forward.1} parent=11 // pred_region
          _
        $region20: #{conv1d_forward.1} parent=11 // pred_fallthru
          _
      $region12: #{conv1d_forward.1} parent=5 // pred_fallthru
        _
      %p143 = scmp.lt.s32.totalorder %s12, 2
      // Predicated region
      $region21: #{conv1d_forward.1} parent=5 // pred_check
        %p144 = pneg %p143
      $region22: #{conv1d_forward.1} parent=5 // pred_check_branch
        %146 = sbr.rel (%p144) target = $region24
      $region23: #{conv1d_forward.1} parent=5 // pred_region
        // Predicated region
        $region25: #{conv1d_forward.1} parent=23 // pred_check
          %p147 = pneg %p46
        $region26: #{conv1d_forward.1} parent=23 // pred_check_branch
          %149 = sbr.rel (%p147) target = $region28
        $region27: #{conv1d_forward.1} parent=23 // pred_region
          %p150 = scmp.lt.s32.totalorder %s19, 1
          %s151 = scalar_select %p150, %s19, 1
          %p152 = scmp.lt.s32.totalorder %s20, 0
          %s153 = scalar_select %p152, %s20, 0
          %s154 = sadd.s32 %s153, %s151
          %s155 = smul.addr %s154, 4
          %s156 = scalar_lea.vmem %s0, %s155
        $region28: #{conv1d_forward.1} parent=23 // pred_fallthru
          _
      $region24: #{conv1d_forward.1} parent=5 // pred_fallthru
        _
      %p157 = scmp.le.s32.totalorder 1, %s12
      %p158 = scmp.lt.s32.totalorder %s12, 3
      %p159 = pnand %p157, %p158
      %p160 = pneg %p159
      // Predicated region
      $region29: #{conv1d_forward.1} parent=5 // pred_check
        _
      $region30: #{conv1d_forward.1} parent=5 // pred_check_branch
        %162 = sbr.rel (%p159) target = $region32
      $region31: #{conv1d_forward.1} parent=5 // pred_region
        %s163 = ssub.s32 %s12, 1
        %p164 = scmp.lt.s32.totalorder %s21, 1
        %s165 = scalar_select %p164, %s21, 1
        %p166 = scmp.lt.s32.totalorder %s22, 0
        %s167 = scalar_select %p166, %s22, 0
        %s168 = sadd.s32 %s167, %s165
        %s169 = smul.addr %s168, 4
        %s170 = scalar_lea.vmem %s0, %s169
        %p171 = pneg %p52
        %p172 = pneg %p49
        %p173 = pneg %p73
        %p174 = pneg %p70
        %p175 = pneg %p94
        %p176 = pneg %p91
        %p177 = pneg %p122
        %p178 = pneg %p119
        %s179 = sand.u32 %s109, 1
        %s180 = scalar_lea.sflag [#allocation3], %s179
        %s181 = sand.u32 %s109, 1
        %s182 = smul.addr %s181, 8
        %s183 = scalar_lea.vmem [#allocation2], %s182
        %p184 = scmp.lt.s32.totalorder %s21, 1
        %s185 = scalar_select %p184, %s21, 1
        %p186 = scmp.lt.s32.totalorder %s22, 0
        %s187 = scalar_select %p186, %s22, 0
        %s188 = sadd.s32 %s187, %s185
        %s189 = smul.addr %s188, 4
        %s190 = scalar_lea.vmem %s0, %s189
        %v192 = vld [vmem:[%s190] sm:$0xf]
        %v193 = vpack.c.bf16 %v192, %v192
        %v194 = vld [vmem:[%s1] sm:$0xf]
        %v195 = vld [vmem:[%s2] sm:$0xff]
        %197 = vset.pattern.permute.xlu0 0
        %198 = vperm.xlu0 %197, %v195
        %v199 = vpop.permute.xlu0 %198
        %vm201 = vcmask 31744
        %v203 = vsel %vm201, %v194, 0
        %vm205 = vcmask 1041408
        %v207 = vsel %vm205, %v193, 0
        %209 = vmatprep.subr.bf16.mxu0 0
        %210 = vmatpush1.bf16.msra.mxu0 0
        %211 = vmatprep.subr.bf16.mxu0 0
        %212 = vmatpush1.bf16.msra.mxu0 0
        %213 = vmatprep.subr.bf16.mxu0 0
        %214 = vmatpush1.bf16.msra.mxu0 0
        %215 = vmatprep.subr.bf16.mxu0 0
        %216 = vmatpush1.bf16.msra.mxu0 0
        %217 = vmatprep.subr.bf16.mxu0 0
        %218 = vmatpush1.bf16.msra.mxu0 0
        %219 = vmatprep.subr.bf16.mxu0 0
        %220 = vmatpush1.bf16.msra.mxu0 0
        %221 = vmatprep.subr.bf16.mxu0 0
        %222 = vmatpush1.bf16.msra.mxu0 0
        %223 = vmatprep.subr.bf16.mxu0 0
        %224 = vmatpush1.bf16.msra.mxu0 %v207
        %225 = vmatprep.subr.bf16.mxu0 0
        %226 = vmatpush2.bf16.msra.mxu0 0
        %227 = vmatprep.subr.bf16.mxu0 0
        %228 = vmatpush2.bf16.msra.mxu0 0
        %229 = vmatprep.subr.bf16.mxu0 0
        %230 = vmatpush2.bf16.msra.mxu0 0
        %231 = vmatprep.subr.bf16.mxu0 0
        %232 = vmatpush2.bf16.msra.mxu0 0
        %233 = vmatprep.subr.bf16.mxu0 0
        %234 = vmatpush2.bf16.msra.mxu0 0
        %235 = vmatprep.subr.bf16.mxu0 0
        %236 = vmatpush2.bf16.msra.mxu0 0
        %237 = vmatprep.subr.bf16.mxu0 0
        %238 = vmatpush2.bf16.msra.mxu0 0
        %239 = vmatprep.subr.bf16.mxu0 0
        %240 = vmatpush2.bf16.msra.mxu0 0
        %241 = vmatprep.mubr.bf16.mxu0 0
        %242 = vmatmul.mubr.bf16.gmra.mxu0 %v203
        %v243 = vpop.f32.mrf.mxu0
        %v244 = vadd.f32 %v199, %v243
        %v245 = vpop.f32.mrf.mxu0
        %v246 = vpop.f32.mrf.mxu0
        %v247 = vpop.f32.mrf.mxu0
        %248 = vdwg.mxu0
        %v249 = vmax.f32 %v244, 0.0
        %vm250 = vcmask 130048
        %251 = vst.msk [vmem:[%s183] sm:$0xff] %vm250, %v249
        %s252 = sand.u32 %s109, 1
        %s253 = scalar_lea.sflag [#allocation3], %s252
        %s254 = sand.u32 %s109, 1
        %s255 = smul.addr %s254, 8
        %s256 = scalar_lea.vmem [#allocation2], %s255
        // Predicated region
        $region33: #{conv1d_forward.1} parent=31 // pred_check
          %p257 = pneg %p119
        $region34: #{conv1d_forward.1} parent=31 // pred_check_branch
          %259 = sbr.rel (%p257) target = $region36
        $region35: #{conv1d_forward.1} parent=31 // pred_region
          %s261 = ssub.s32 128, 128
          %262 = vsyncadd %s253, %s261
          %s263 = sadd.s32 %s22, %s21
          %s264 = smul.addr %s263, 128
          %s265 = scalar_lea.hbm %s3, %s264
          %s267 = sshll.u32 %s256, 4
          %s268 = int_to_ptr.vmem [resolvable:$true] %s267
          %270 = dma.vmem_to_hbm [thread:$0]  %s268, 128, %s265, %s253
        $region36: #{conv1d_forward.1} parent=31 // pred_fallthru
          _
      $region32: #{conv1d_forward.1} parent=5 // pred_fallthru
        _
      %p271 = scmp.le.s32.totalorder 2, %s12
      // Predicated region
      $region37: #{conv1d_forward.1} parent=5 // pred_check
        %p272 = pneg %p271
      $region38: #{conv1d_forward.1} parent=5 // pred_check_branch
        %274 = sbr.rel (%p272) target = $region40
      $region39: #{conv1d_forward.1} parent=5 // pred_region
        %s275 = ssub.s32 %s12, 2
        // Predicated region
        $region41: #{conv1d_forward.1} parent=39 // pred_check
          %p276 = pneg %p125
        $region42: #{conv1d_forward.1} parent=39 // pred_check_branch
          %278 = sbr.rel (%p276) target = $region44
        $region43: #{conv1d_forward.1} parent=39 // pred_region
          %s279 = sand.u32 %s110, 1
          %s280 = scalar_lea.sflag [#allocation3], %s279
          %s281 = sand.u32 %s110, 1
          %s282 = smul.addr %s281, 8
          %s283 = scalar_lea.vmem [#allocation2], %s282
          %284 = dma.done %s280, 128
        $region44: #{conv1d_forward.1} parent=39 // pred_fallthru
          _
      $region40: #{conv1d_forward.1} parent=5 // pred_fallthru
        _
    $region6: #{conv1d_forward.1} parent=1 // loop_footer
      %s16 = sadd.s32 1, %s12
    $region7: #{conv1d_forward.1} parent=1 // loop_footer_branch
      %11 = sbr.rel target = $region3
    $region8: #{conv1d_forward.1} parent=1 // loop_exit
      _
    %285 = vsyncpa [#allocation3], 1
    %s286 = scalar_lea.sflag [#allocation3], 1
    %287 = vsyncpa %s286, 1

</llo_original>
